<compile_context>
chip_gen: v5e
topology: v5e:2x2
jax: 0.10.0
libtpu: 0.0.40
codegen_flags: <defaults>
</compile_context>

<pallas_src>
import jax
import jax.numpy as jnp
from jax.experimental import pallas as pl
from jax.experimental.pallas import tpu as pltpu

IN_FEAT = 64
OUT_FEAT = 32            # per DSFE branch
NUM_BRANCHES = 14        # SEED cross-subject MsMda: 14 source domains
LANE = 128
FUSED_WIDTH = NUM_BRANCHES * OUT_FEAT                      # 448
PADDED_WIDTH = ((FUSED_WIDTH + LANE - 1) // LANE) * LANE   # 512 (lane-dense)
BN_EPS = 1e-5
LEAKY_SLOPE = 0.01


def dsfe_fused_kernel(x_ref, w_ref, gb_ref, o_ref):
    # Whole problem (small N, 64-in / 512-out lanes) is one VMEM-resident
    # block: bf16 MXU matmul, single-pass batch stats, fused affine tail.
    x = x_ref[...].astype(jnp.bfloat16)                  # (N, 64)    bf16
    w = w_ref[...]                                       # (64, 512)  bf16
    gb = gb_ref[...]                                     # (2, 512)   f32

    # Linear (bias-free: a per-column constant cancels under training BN).
    y = jnp.dot(x, w, preferred_element_type=jnp.float32)    # (N, 512) f32

    # BatchNorm1d, training mode, single elementwise pass:
    #   mean = E[y], var = E[y^2] - mean^2 (biased), affine folded into
    #   scale/shift so the tail is one mul+add per element.
    n = y.shape[0]
    inv_n = 1.0 / n
    s1 = jnp.sum(y, axis=0, keepdims=True)                   # (1, 512)
    s2 = jnp.sum(y * y, axis=0, keepdims=True)               # (1, 512)
    mean = s1 * inv_n
    var = jnp.maximum(s2 * inv_n - mean * mean, 0.0)
    inv_std = jax.lax.rsqrt(var + BN_EPS)

    gamma = gb[0:1, :]
    beta = gb[1:2, :]
    scale = gamma * inv_std                                  # (1, 512)
    shift = beta - mean * scale                              # (1, 512)
    z = y * scale + shift                                    # (N, 512)

    # LeakyReLU(0.01) as a single max.
    o_ref[...] = jnp.maximum(z, LEAKY_SLOPE * z)


def dsfe_forward(x, w_fused_t, gb):
    """Fused multi-branch DSFE forward.

    x:         (N, 64)          f32
    w_fused_t: (64, PAD_WIDTH)  bf16 -- per-branch weights, pre-transposed,
                                        concatenated along the output axis and
                                        zero-padded to a multiple of 128 lanes
    gb:        (2, PAD_WIDTH)   f32  -- row 0 = gamma, row 1 = beta (zero-pad)
    Returns (N, PAD_WIDTH) f32; columns [i*32:(i+1)*32] are branch i's output.
    """
    n = x.shape[0]
    assert n > 1, "training-mode BatchNorm1d requires a batch of N > 1"
    out_width = w_fused_t.shape[1]
    assert out_width % LANE == 0, "output width must be lane-dense (x128)"
    vmem = pltpu.MemorySpace.VMEM
    return pl.pallas_call(
        dsfe_fused_kernel,
        out_shape=jax.ShapeDtypeStruct((n, out_width), jnp.float32),
        in_specs=[
            pl.BlockSpec(memory_space=vmem),  # x        (N, 64)       f32
            pl.BlockSpec(memory_space=vmem),  # w_fused  (64, 512)     bf16
            pl.BlockSpec(memory_space=vmem),  # gamma/beta packed (2, 512)
        ],
        out_specs=pl.BlockSpec(memory_space=vmem),
        compiler_params=pltpu.CompilerParams(
            # Future-proof larger N single-block on v5e/v6e while staying
            # below v7x's 64 MiB physical VMEM.  This problem needs < 1 MiB.
            vmem_limit_bytes=48 * 1024 * 1024,
        ),
    )(x, w_fused_t, gb)
    # TODO(synk): for very large N (esp. v7x, 64 MiB VMEM / 2 TCs), add a
    # "parallel" batch grid axis with a sum/sumsq reduction pass followed by a
    # recompute-the-matmul normalize pass (weights pinned via index_map
    # lambda i: (0, 0)); at MsMda sizes the single block is already resident.
    # TODO(synk): MsMda's per-branch cls_fc (32 -> num_classes) and the MMD
    # statistic could be fused into this kernel's tail to drop more launches,
    # but they are outside the DSFE module spec.


def init_branch_params(key):
    """PyTorch-default init for one DSFE branch (Linear + BatchNorm1d)."""
    k_w, k_b = jax.random.split(key)
    bound = 1.0 / (IN_FEAT ** 0.5)
    w = jax.random.uniform(k_w, (OUT_FEAT, IN_FEAT), jnp.float32, -bound, bound)
    b = jax.random.uniform(k_b, (OUT_FEAT,), jnp.float32, -bound, bound)
    gamma = jnp.ones((OUT_FEAT,), jnp.float32)
    beta = jnp.zeros((OUT_FEAT,), jnp.float32)
    return w, b, gamma, beta


def pack_fused_params(branch_params):
    """Pre-transpose, concatenate and zero-pad branch weights to 128-lane
    multiples; pack gamma/beta into one (2, PAD_WIDTH) array."""
    pad = PADDED_WIDTH - FUSED_WIDTH
    w_fused_t = jnp.concatenate([w.T for (w, _, _, _) in branch_params], axis=1)
    w_fused_t = jnp.pad(w_fused_t, ((0, 0), (0, pad))).astype(jnp.bfloat16)
    gamma_f = jnp.pad(
        jnp.concatenate([g for (_, _, g, _) in branch_params], axis=0), (0, pad))
    beta_f = jnp.pad(
        jnp.concatenate([bt for (_, _, _, bt) in branch_params], axis=0), (0, pad))
    gb = jnp.stack([gamma_f, beta_f], axis=0)          # (2, PADDED_WIDTH) f32
    return w_fused_t, gb


def dsfe_reference(x, w, b, gamma, beta):
    """Pure-JAX single-branch reference, INCLUDING the Linear bias
    (PyTorch training-mode semantics, f32 matmul)."""
    y = x @ w.T + b
    mean = jnp.mean(y, axis=0, keepdims=True)
    var = jnp.mean((y - mean) ** 2, axis=0, keepdims=True)
    z = gamma * (y - mean) / jnp.sqrt(var + BN_EPS) + beta
    return jnp.where(z > 0, z, LEAKY_SLOPE * z)


def dsfe_reference_bf16_inputs(x, w, b, gamma, beta):
    """Same reference but with the matmul operands rounded to bf16 (matching
    what the kernel feeds the MXU) -- isolates the kernel-structure check
    (bias drop, single-pass variance, folded affine) from bf16 rounding."""
    xb = x.astype(jnp.bfloat16).astype(jnp.float32)
    wb = w.astype(jnp.bfloat16).astype(jnp.float32)
    return dsfe_reference(xb, wb, b, gamma, beta)


if __name__ == "__main__":
    key = jax.random.PRNGKey(0)
    k_x, *k_branches = jax.random.split(key, NUM_BRANCHES + 1)

    # Small batch of 64-dim features, shared by all source-domain branches.
    N = 16
    x = jax.random.normal(k_x, (N, IN_FEAT), jnp.float32)

    # Per-branch parameters (as the individual PyTorch DSFE modules hold them).
    branch_params = [init_branch_params(k) for k in k_branches]
    w_fused_t, gb = pack_fused_params(branch_params)

    out = dsfe_forward(x, w_fused_t, gb)
    out = jax.block_until_ready(out)
    assert out.shape == (N, PADDED_WIDTH)

    for i, (w, b, gamma, beta) in enumerate(branch_params):
        got_i = out[:, i * OUT_FEAT:(i + 1) * OUT_FEAT]
        # 1) Structure check (bias drop, one-pass BN, folded affine): tight
        #    tolerance against a reference using the same bf16 matmul operands.
        ref_struct = dsfe_reference_bf16_inputs(x, w, b, gamma, beta)
        assert jnp.allclose(got_i, ref_struct, atol=2e-3, rtol=2e-3), (
            f"branch {i} mismatch vs bf16-operand reference")
        # 2) Semantics check vs the full-f32 PyTorch-style reference (bias
        #    included): relaxed tolerance for bf16 matmul-operand rounding.
        ref_f32 = dsfe_reference(x, w, b, gamma, beta)
        assert jnp.allclose(got_i, ref_f32, atol=1e-1, rtol=5e-2), (
            f"branch {i} mismatch vs f32 reference")

    # Padding lanes must stay exactly zero (zero weights/gamma/beta).
    assert jnp.all(out[:, FUSED_WIDTH:] == 0.0)

    print("KERNEL_OK")
</pallas_src>

<mosaic_0001>
module attributes {stable_mosaic.version = 11 : i64} {
  func.func @dsfe_fused_kernel(%arg0: memref<16x64xf32, #tpu.memory_space<vmem>>, %arg1: memref<64x512xbf16, #tpu.memory_space<vmem>>, %arg2: memref<2x512xf32, #tpu.memory_space<vmem>>, %arg3: memref<16x512xf32, #tpu.memory_space<vmem>>) attributes {dimension_semantics = [], scalar_prefetch = 0 : i64, scratch_operands = 0 : i64, tpu.core_type = #tpu.core_type<tc>} {
    %c0 = arith.constant 0 : index
    %c0_0 = arith.constant 0 : index
    %0 = vector.load %arg0[%c0, %c0_0] : memref<16x64xf32, #tpu.memory_space<vmem>>, vector<16x64xf32>
    %1 = arith.truncf %0 : vector<16x64xf32> to vector<16x64xbf16>
    %c0_1 = arith.constant 0 : index
    %c0_2 = arith.constant 0 : index
    %2 = vector.load %arg1[%c0_1, %c0_2] : memref<64x512xbf16, #tpu.memory_space<vmem>>, vector<64x512xbf16>
    %c0_3 = arith.constant 0 : index
    %c0_4 = arith.constant 0 : index
    %3 = vector.load %arg2[%c0_3, %c0_4] : memref<2x512xf32, #tpu.memory_space<vmem>>, vector<2x512xf32>
    %cst = arith.constant dense<0.000000e+00> : vector<16x512xf32>
    %4 = tpu.matmul %1, %2, %cst {dimension_numbers = #tpu.dot_dimension_numbers<[1], [0], [0], [1], [0, 0, 1, 1], [], []>} : vector<16x64xbf16>, vector<64x512xbf16>, vector<16x512xf32> -> vector<16x512xf32>
    %cst_5 = arith.constant dense<0.000000e+00> : vector<512xf32>
    %5 = vector.multi_reduction <add>, %4, %cst_5 [0] : vector<16x512xf32> to vector<512xf32>
    %6 = vector.shape_cast %5 : vector<512xf32> to vector<1x512xf32>
    %7 = arith.mulf %4, %4 : vector<16x512xf32>
    %cst_6 = arith.constant dense<0.000000e+00> : vector<512xf32>
    %8 = vector.multi_reduction <add>, %7, %cst_6 [0] : vector<16x512xf32> to vector<512xf32>
    %9 = vector.shape_cast %8 : vector<512xf32> to vector<1x512xf32>
    %cst_7 = arith.constant 6.250000e-02 : f32
    %10 = vector.broadcast %cst_7 : f32 to vector<1x512xf32>
    %11 = arith.mulf %6, %10 : vector<1x512xf32>
    %cst_8 = arith.constant 6.250000e-02 : f32
    %12 = vector.broadcast %cst_8 : f32 to vector<1x512xf32>
    %13 = arith.mulf %9, %12 : vector<1x512xf32>
    %14 = arith.mulf %11, %11 : vector<1x512xf32>
    %15 = arith.subf %13, %14 : vector<1x512xf32>
    %cst_9 = arith.constant 0.000000e+00 : f32
    %16 = vector.broadcast %cst_9 : f32 to vector<1x512xf32>
    %17 = arith.maximumf %15, %16 : vector<1x512xf32>
    %cst_10 = arith.constant 9.99999974E-6 : f32
    %18 = vector.broadcast %cst_10 : f32 to vector<1x512xf32>
    %19 = arith.addf %17, %18 : vector<1x512xf32>
    %20 = math.rsqrt %19 : vector<1x512xf32>
    %21 = vector.extract_strided_slice %3 {offsets = [0, 0], sizes = [1, 512], strides = [1, 1]} : vector<2x512xf32> to vector<1x512xf32>
    %22 = vector.extract_strided_slice %3 {offsets = [1, 0], sizes = [1, 512], strides = [1, 1]} : vector<2x512xf32> to vector<1x512xf32>
    %23 = arith.mulf %21, %20 : vector<1x512xf32>
    %24 = arith.mulf %11, %23 : vector<1x512xf32>
    %25 = arith.subf %22, %24 : vector<1x512xf32>
    %26 = vector.broadcast %23 : vector<1x512xf32> to vector<16x512xf32>
    %27 = arith.mulf %4, %26 : vector<16x512xf32>
    %28 = vector.broadcast %25 : vector<1x512xf32> to vector<16x512xf32>
    %29 = arith.addf %27, %28 : vector<16x512xf32>
    %cst_11 = arith.constant 0.00999999977 : f32
    %30 = vector.broadcast %cst_11 : f32 to vector<16x512xf32>
    %31 = arith.mulf %30, %29 : vector<16x512xf32>
    %32 = arith.maximumf %29, %31 : vector<16x512xf32>
    %c0_12 = arith.constant 0 : index
    %c0_13 = arith.constant 0 : index
    %33 = vector.load %arg3[%c0_12, %c0_13] : memref<16x512xf32, #tpu.memory_space<vmem>>, vector<16x512xf32>
    tpu.vector_store %arg3[%c0_12, %c0_13], %32 {strides = array<i32>} : memref<16x512xf32, #tpu.memory_space<vmem>>, vector<16x512xf32>,
    return
  }
}

</mosaic_0001>

<llo_original>
// kernel: tpu_custom_call.1
$region0: #{tpu_custom_call.1}
  #allocation0 [shape = 'u32[]', space=smem, size = 0x4, offset = 0x4, fixed_abs, tag = 'smem constant byte address 0x4 - core index']
  #allocation1 [shape = 'u32[72,128]{1,0:T(1,128)}', space=vmem, size = 0x9000, scoped, tag = 'internal scratch']
  %s0 = inlined_call_operand.hbm [shape: f32[16,64], index: 0, kind: input, shape index: {}]
  %s1 = inlined_call_operand.hbm [shape: bf16[64,512], index: 1, kind: input, shape index: {}]
  %s2 = inlined_call_operand.hbm [shape: f32[2,512], index: 2, kind: input, shape index: {}]
  %s3 = inlined_call_operand.hbm [shape: f32[16,512], index: 3, kind: output, shape index: {}]
  %s4 = sld [smem:[#allocation0]]
  $region34: #{tpu_custom_call.1} parent=0
    _
  %s6 = ssub.s32 1, %s4
  %s7 = scalar_select 0, %s6, %s4
  $region1: #{tpu_custom_call.1} parent=0
    #allocation2 [shape = 'u8[8192]{0}', space=vmem, size = 0x2000, scoped, tag = 'input window, operand 0, single buffered']
    #allocation3 [shape = 's32[1]{0}', space=sflag, size = 0x4, scoped, tag = 'scoped memory for tpu_custom_call.1']
    #allocation4 [shape = 's32[1]{0}', space=sflag, size = 0x4, scoped, tag = 'scoped memory for tpu_custom_call.1']
    #allocation5 [shape = 'u8[65536]{0}', space=vmem, size = 0x10000, scoped, tag = 'input window, operand 1, single buffered']
    #allocation6 [shape = 's32[1]{0}', space=sflag, size = 0x4, scoped, tag = 'scoped memory for tpu_custom_call.1']
    #allocation7 [shape = 'u8[4096]{0}', space=vmem, size = 0x1000, scoped, tag = 'input window, operand 2, single buffered']
    #allocation8 [shape = 'u8[32768]{0}', space=vmem, size = 0x8000, scoped, tag = 'output window, operand 0, single buffered']
    %8 = vsyncpa [#allocation3], 0
    %9 = vsyncpa [#allocation6], 0
    %10 = vsyncpa [#allocation4], 0
    // Predicated region
    $region2: #{tpu_custom_call.1} parent=1 // pred_check
      _
    $region3: #{tpu_custom_call.1} parent=1 // pred_check_branch
      %12 = sbr.rel (0) target = $region5
    $region4: #{tpu_custom_call.1} parent=1 // pred_region
      %14 = vsyncadd [#allocation3], 0
      %s15 = sshll.u32 %s0, 4
      %s16 = int_to_ptr.hbm [resolvable:$true] %s15
      %s17 = sshll.u32 [#allocation2], 4
      %s18 = int_to_ptr.vmem [resolvable:$true] %s17
      %23 = dma.hbm_to_vmem [thread:$0]  %s16, 256, %s18, [#allocation3], 128, 128, 8
    $region5: #{tpu_custom_call.1} parent=1 // pred_fallthru
      _
    // Predicated region
    $region6: #{tpu_custom_call.1} parent=1 // pred_check
      _
    $region7: #{tpu_custom_call.1} parent=1 // pred_check_branch
      %25 = sbr.rel (0) target = $region9
    $region8: #{tpu_custom_call.1} parent=1 // pred_region
      %27 = vsyncadd [#allocation6], 0
      %s28 = sshll.u32 %s1, 4
      %s29 = int_to_ptr.hbm [resolvable:$true] %s28
      %s30 = sshll.u32 [#allocation5], 4
      %s31 = int_to_ptr.vmem [resolvable:$true] %s30
      %36 = dma.hbm_to_vmem [thread:$0]  %s29, 2048, %s31, [#allocation6], 256, 256, 16
    $region9: #{tpu_custom_call.1} parent=1 // pred_fallthru
      _
    // Predicated region
    $region10: #{tpu_custom_call.1} parent=1 // pred_check
      _
    $region11: #{tpu_custom_call.1} parent=1 // pred_check_branch
      %38 = sbr.rel (0) target = $region13
    $region12: #{tpu_custom_call.1} parent=1 // pred_region
      %40 = vsyncadd [#allocation6], 0
      %s42 = sshll.u32 %s2, 4
      %s43 = int_to_ptr.hbm [resolvable:$true] %s42
      %s44 = sshll.u32 [#allocation7], 4
      %s45 = int_to_ptr.vmem [resolvable:$true] %s44
      %47 = dma.hbm_to_vmem [thread:$0]  %s43, 128, %s45, [#allocation6]
    $region13: #{tpu_custom_call.1} parent=1 // pred_fallthru
      _
    // Predicated region
    $region14: #{tpu_custom_call.1} parent=1 // pred_check
      _
    $region15: #{tpu_custom_call.1} parent=1 // pred_check_branch
      %49 = sbr.rel (0) target = $region17
    $region16: #{tpu_custom_call.1} parent=1 // pred_region
      %51 = dma.done [#allocation3], 256
    $region17: #{tpu_custom_call.1} parent=1 // pred_fallthru
      _
    // Predicated region
    $region18: #{tpu_custom_call.1} parent=1 // pred_check
      _
    $region19: #{tpu_custom_call.1} parent=1 // pred_check_branch
      %53 = sbr.rel (0) target = $region21
    $region20: #{tpu_custom_call.1} parent=1 // pred_region
      %55 = dma.done [#allocation6], 2048
    $region21: #{tpu_custom_call.1} parent=1 // pred_fallthru
      _
    // Predicated region
    $region22: #{tpu_custom_call.1} parent=1 // pred_check
      _
    $region23: #{tpu_custom_call.1} parent=1 // pred_check_branch
      %57 = sbr.rel (0) target = $region25
    $region24: #{tpu_custom_call.1} parent=1 // pred_region
      %59 = dma.done [#allocation6], 128
    $region25: #{tpu_custom_call.1} parent=1 // pred_fallthru
      _
    %v61 = vld [vmem:[#allocation2] sm:$0xff]
    %v62 = vld [vmem:[#allocation2 + $0x8] sm:$0xff]
    %v63 = vpack.c.bf16 %v62, %v61
    %v64 = vld [vmem:[#allocation5] sm:$0xff]
    %v65 = vld [vmem:[#allocation5 + $0x8] sm:$0xff]
    %v66 = vld [vmem:[#allocation5 + $0x10] sm:$0xff]
    %v67 = vld [vmem:[#allocation5 + $0x18] sm:$0xff]
    %v68 = vld [vmem:[#allocation5 + $0x20] sm:$0xff]
    %v69 = vld [vmem:[#allocation5 + $0x28] sm:$0xff]
    %v70 = vld [vmem:[#allocation5 + $0x30] sm:$0xff]
    %v71 = vld [vmem:[#allocation5 + $0x38] sm:$0xff]
    %v72 = vld [vmem:[#allocation5 + $0x40] sm:$0xff]
    %v73 = vld [vmem:[#allocation5 + $0x48] sm:$0xff]
    %v74 = vld [vmem:[#allocation5 + $0x50] sm:$0xff]
    %v75 = vld [vmem:[#allocation5 + $0x58] sm:$0xff]
    %v76 = vld [vmem:[#allocation5 + $0x60] sm:$0xff]
    %v77 = vld [vmem:[#allocation5 + $0x68] sm:$0xff]
    %v78 = vld [vmem:[#allocation5 + $0x70] sm:$0xff]
    %v79 = vld [vmem:[#allocation5 + $0x78] sm:$0xff]
    %v80 = vld [vmem:[#allocation7] sm:$0xff]
    %v97 = vunpack.c.l.b16 %v64
    %v98 = vunpack.c.h.b16 %v64
    %v99 = vunpack.c.l.b16 %v65
    %v100 = vunpack.c.h.b16 %v65
    %v101 = vunpack.c.l.b16 %v66
    %v102 = vunpack.c.h.b16 %v66
    %v103 = vunpack.c.l.b16 %v67
    %v104 = vunpack.c.h.b16 %v67
    %v105 = vunpack.c.l.b16 %v68
    %v106 = vunpack.c.h.b16 %v68
    %v107 = vunpack.c.l.b16 %v69
    %v108 = vunpack.c.h.b16 %v69
    %v109 = vunpack.c.l.b16 %v70
    %v110 = vunpack.c.h.b16 %v70
    %v111 = vunpack.c.l.b16 %v71
    %v112 = vunpack.c.h.b16 %v71
    %v113 = vunpack.c.l.b16 %v72
    %v114 = vunpack.c.h.b16 %v72
    %v115 = vunpack.c.l.b16 %v73
    %v116 = vunpack.c.h.b16 %v73
    %v117 = vunpack.c.l.b16 %v74
    %v118 = vunpack.c.h.b16 %v74
    %v119 = vunpack.c.l.b16 %v75
    %v120 = vunpack.c.h.b16 %v75
    %v121 = vunpack.c.l.b16 %v76
    %v122 = vunpack.c.h.b16 %v76
    %v123 = vunpack.c.l.b16 %v77
    %v124 = vunpack.c.h.b16 %v77
    %v125 = vunpack.c.l.b16 %v78
    %v126 = vunpack.c.h.b16 %v78
    %v127 = vunpack.c.l.b16 %v79
    %v128 = vunpack.c.h.b16 %v79
    %v129 = vpack.c.b16 %v101, %v97
    %v130 = vpack.c.b16 %v102, %v98
    %v131 = vpack.c.b16 %v103, %v99
    %v132 = vpack.c.b16 %v104, %v100
    %v133 = vpack.c.b16 %v109, %v105
    %v134 = vpack.c.b16 %v110, %v106
    %v135 = vpack.c.b16 %v111, %v107
    %v136 = vpack.c.b16 %v112, %v108
    %v137 = vpack.c.b16 %v117, %v113
    %v138 = vpack.c.b16 %v118, %v114
    %v139 = vpack.c.b16 %v119, %v115
    %v140 = vpack.c.b16 %v120, %v116
    %v141 = vpack.c.b16 %v125, %v121
    %v142 = vpack.c.b16 %v126, %v122
    %v143 = vpack.c.b16 %v127, %v123
    %v144 = vpack.c.b16 %v128, %v124
    %vm161 = vcmask 523264
    %v163 = vsel %vm161, %v63, 0
    %165 = vmatpush.bf16.msra.mxu0 0
    %166 = vmatpush.bf16.msra.mxu0 0
    %167 = vmatpush.bf16.msra.mxu0 0
    %168 = vmatpush.bf16.msra.mxu0 0
    %169 = vmatpush.bf16.msra.mxu0 %v141
    %170 = vmatpush.bf16.msra.mxu0 %v137
    %171 = vmatpush.bf16.msra.mxu0 %v133
    %172 = vmatpush.bf16.msra.mxu0 %v129
    %173 = vmatmul.bf16.gmra.mxu0 %v163
    %v174 = vpop.f32.mrf.mxu0
    %v175 = vadd.f32 0.0, %v174
    %v176 = vpop.f32.mrf.mxu0
    %v177 = vadd.f32 0.0, %v176
    %178 = vdwg.mxu0
    %179 = vmatpush.bf16.msra.mxu0 0
    %180 = vmatpush.bf16.msra.mxu0 0
    %181 = vmatpush.bf16.msra.mxu0 0
    %182 = vmatpush.bf16.msra.mxu0 0
    %183 = vmatpush.bf16.msra.mxu0 %v142
    %184 = vmatpush.bf16.msra.mxu0 %v138
    %185 = vmatpush.bf16.msra.mxu0 %v134
    %186 = vmatpush.bf16.msra.mxu0 %v130
    %187 = vmatmul.bf16.gmra.mxu0 %v163
    %v188 = vpop.f32.mrf.mxu0
    %v189 = vadd.f32 0.0, %v188
    %v190 = vpop.f32.mrf.mxu0
    %v191 = vadd.f32 0.0, %v190
    %192 = vdwg.mxu0
    %193 = vmatpush.bf16.msra.mxu0 0
    %194 = vmatpush.bf16.msra.mxu0 0
    %195 = vmatpush.bf16.msra.mxu0 0
    %196 = vmatpush.bf16.msra.mxu0 0
    %197 = vmatpush.bf16.msra.mxu0 %v143
    %198 = vmatpush.bf16.msra.mxu0 %v139
    %199 = vmatpush.bf16.msra.mxu0 %v135
    %200 = vmatpush.bf16.msra.mxu0 %v131
    %201 = vmatmul.bf16.gmra.mxu0 %v163
    %v202 = vpop.f32.mrf.mxu0
    %v203 = vadd.f32 0.0, %v202
    %v204 = vpop.f32.mrf.mxu0
    %v205 = vadd.f32 0.0, %v204
    %206 = vdwg.mxu0
    %207 = vmatpush.bf16.msra.mxu0 0
    %208 = vmatpush.bf16.msra.mxu0 0
    %209 = vmatpush.bf16.msra.mxu0 0
    %210 = vmatpush.bf16.msra.mxu0 0
    %211 = vmatpush.bf16.msra.mxu0 %v144
    %212 = vmatpush.bf16.msra.mxu0 %v140
    %213 = vmatpush.bf16.msra.mxu0 %v136
    %214 = vmatpush.bf16.msra.mxu0 %v132
    %215 = vmatmul.bf16.gmra.mxu0 %v163
    %v216 = vpop.f32.mrf.mxu0
    %v217 = vadd.f32 0.0, %v216
    %v218 = vpop.f32.mrf.mxu0
    %v219 = vadd.f32 0.0, %v218
    %220 = vdwg.mxu0
    %v221 = vadd.f32 %v175, %v177
    %v222 = vrot.slane %v221, 4
    %v223 = vadd.f32 %v221, %v222
    %v224 = vrot.slane %v223, 2
    %v225 = vadd.f32 %v223, %v224
    %v226 = vrot.slane %v225, 1
    %v227 = vadd.f32 %v225, %v226
    %v228 = vadd.f32 %v189, %v191
    %v229 = vrot.slane %v228, 4
    %v230 = vadd.f32 %v228, %v229
    %v231 = vrot.slane %v230, 2
    %v232 = vadd.f32 %v230, %v231
    %v233 = vrot.slane %v232, 1
    %v234 = vadd.f32 %v232, %v233
    %v235 = vadd.f32 %v203, %v205
    %v236 = vrot.slane %v235, 4
    %v237 = vadd.f32 %v235, %v236
    %v238 = vrot.slane %v237, 2
    %v239 = vadd.f32 %v237, %v238
    %v240 = vrot.slane %v239, 1
    %v241 = vadd.f32 %v239, %v240
    %v242 = vadd.f32 %v217, %v219
    %v243 = vrot.slane %v242, 4
    %v244 = vadd.f32 %v242, %v243
    %v245 = vrot.slane %v244, 2
    %v246 = vadd.f32 %v244, %v245
    %v247 = vrot.slane %v246, 1
    %v248 = vadd.f32 %v246, %v247
    %v249 = vmul.f32 %v175, %v175
    %v250 = vmul.f32 %v189, %v189
    %v251 = vmul.f32 %v203, %v203
    %v252 = vmul.f32 %v217, %v217
    %v253 = vmul.f32 %v177, %v177
    %v254 = vmul.f32 %v191, %v191
    %v255 = vmul.f32 %v205, %v205
    %v256 = vmul.f32 %v219, %v219
    %v257 = vadd.f32 %v249, %v253
    %v258 = vrot.slane %v257, 4
    %v259 = vadd.f32 %v257, %v258
    %v260 = vrot.slane %v259, 2
    %v261 = vadd.f32 %v259, %v260
    %v262 = vrot.slane %v261, 1
    %v263 = vadd.f32 %v261, %v262
    %v264 = vadd.f32 %v250, %v254
    %v265 = vrot.slane %v264, 4
    %v266 = vadd.f32 %v264, %v265
    %v267 = vrot.slane %v266, 2
    %v268 = vadd.f32 %v266, %v267
    %v269 = vrot.slane %v268, 1
    %v270 = vadd.f32 %v268, %v269
    %v271 = vadd.f32 %v251, %v255
    %v272 = vrot.slane %v271, 4
    %v273 = vadd.f32 %v271, %v272
    %v274 = vrot.slane %v273, 2
    %v275 = vadd.f32 %v273, %v274
    %v276 = vrot.slane %v275, 1
    %v277 = vadd.f32 %v275, %v276
    %v278 = vadd.f32 %v252, %v256
    %v279 = vrot.slane %v278, 4
    %v280 = vadd.f32 %v278, %v279
    %v281 = vrot.slane %v280, 2
    %v282 = vadd.f32 %v280, %v281
    %v283 = vrot.slane %v282, 1
    %v284 = vadd.f32 %v282, %v283
    %v285 = vmul.f32 %v227, 0.0625
    %v286 = vmul.f32 %v234, 0.0625
    %v287 = vmul.f32 %v241, 0.0625
    %v288 = vmul.f32 %v248, 0.0625
    %v289 = vmul.f32 %v263, 0.0625
    %v290 = vmul.f32 %v270, 0.0625
    %v291 = vmul.f32 %v277, 0.0625
    %v292 = vmul.f32 %v284, 0.0625
    %v293 = vmul.f32 %v285, %v285
    %v294 = vmul.f32 %v286, %v286
    %v295 = vmul.f32 %v287, %v287
    %v296 = vmul.f32 %v288, %v288
    %v297 = vsub.f32 %v289, %v293
    %v298 = vsub.f32 %v290, %v294
    %v299 = vsub.f32 %v291, %v295
    %v300 = vsub.f32 %v292, %v296
    %v301 = vmax.f32 %v297, 0.0
    %v302 = vmax.f32 %v298, 0.0
    %v303 = vmax.f32 %v299, 0.0
    %v304 = vmax.f32 %v300, 0.0
    %v305 = vadd.f32 %v301, 1e-05
    %v306 = vadd.f32 %v302, 1e-05
    %v307 = vadd.f32 %v303, 1e-05
    %v308 = vadd.f32 %v304, 1e-05
    %v309 = vrsqrt.pop %v305
    %v310 = vmul.f32 %v309, %v305
    %v311 = vmul.f32 %v310, %v309
    %v312 = vmul.f32 0.5, %v311
    %v313 = vsub.f32 1.5, %v312
    %v314 = vmul.f32 %v309, %v313
    %vm315 = vweird.f32 %v305
    %vm316 = vweird.f32 %v309
    %vm317 = vmor %vm315, %vm316
    %v318 = vsel %vm317, %v309, %v314
    %v319 = vrsqrt.pop %v306
    %v320 = vmul.f32 %v319, %v306
    %v321 = vmul.f32 %v320, %v319
    %v322 = vmul.f32 0.5, %v321
    %v323 = vsub.f32 1.5, %v322
    %v324 = vmul.f32 %v319, %v323
    %vm325 = vweird.f32 %v306
    %vm326 = vweird.f32 %v319
    %vm327 = vmor %vm325, %vm326
    %v328 = vsel %vm327, %v319, %v324
    %v329 = vrsqrt.pop %v307
    %v330 = vmul.f32 %v329, %v307
    %v331 = vmul.f32 %v330, %v329
    %v332 = vmul.f32 0.5, %v331
    %v333 = vsub.f32 1.5, %v332
    %v334 = vmul.f32 %v329, %v333
    %vm335 = vweird.f32 %v307
    %vm336 = vweird.f32 %v329
    %vm337 = vmor %vm335, %vm336
    %v338 = vsel %vm337, %v329, %v334
    %v339 = vrsqrt.pop %v308
    %v340 = vmul.f32 %v339, %v308
    %v341 = vmul.f32 %v340, %v339
    %v342 = vmul.f32 0.5, %v341
    %v343 = vsub.f32 1.5, %v342
    %v344 = vmul.f32 %v339, %v343
    %vm345 = vweird.f32 %v308
    %vm346 = vweird.f32 %v339
    %vm347 = vmor %vm345, %vm346
    %v348 = vsel %vm347, %v339, %v344
    %v353 = vrot.slane %v328, 6
    %v354 = vrot.slane %v338, 4
    %v355 = vrot.slane %v348, 2
    %vm356 = vcmask 1041408
    %v357 = vsel %vm356, %v318, %v353
    %vm358 = vcmask 1045508
    %v359 = vsel %vm358, %v354, %v355
    %vm360 = vcmask 1043456
    %v361 = vsel %vm360, %v357, %v359
    %v363 = vmul.f32 %v80, %v361
    %v365 = vperm.slane %v363, 0
    %v366 = vperm.slane %v363, 2
    %v367 = vperm.slane %v363, 4
    %v368 = vperm.slane %v363, 6
    %v373 = vmul.f32 %v285, %v365
    %v374 = vmul.f32 %v286, %v366
    %v375 = vmul.f32 %v287, %v367
    %v376 = vmul.f32 %v288, %v368
    %v381 = vrot.slane %v374, 6
    %v382 = vrot.slane %v375, 4
    %v383 = vrot.slane %v376, 2
    %v384 = vsel %vm356, %v373, %v381
    %v385 = vsel %vm358, %v382, %v383
    %v386 = vsel %vm360, %v384, %v385
    %v387 = vrot.slane %v386, 7
    %v389 = vsub.f32 %v80, %v387
    %v390 = vperm.slane %v365, 0
    %v391 = vperm.slane %v366, 0
    %v392 = vperm.slane %v367, 0
    %v393 = vperm.slane %v368, 0
    %v394 = vmul.f32 %v175, %v390
    %v395 = vmul.f32 %v189, %v391
    %v396 = vmul.f32 %v203, %v392
    %v397 = vmul.f32 %v217, %v393
    %v398 = vmul.f32 %v177, %v390
    %v399 = vmul.f32 %v191, %v391
    %v400 = vmul.f32 %v205, %v392
    %v401 = vmul.f32 %v219, %v393
    %v403 = vperm.slane %v389, 1
    %v404 = vperm.slane %v389, 3
    %v405 = vperm.slane %v389, 5
    %v406 = vperm.slane %v389, 7
    %v411 = vperm.slane %v403, 1
    %v412 = vperm.slane %v404, 1
    %v413 = vperm.slane %v405, 1
    %v414 = vperm.slane %v406, 1
    %v415 = vadd.f32 %v394, %v411
    %v416 = vadd.f32 %v395, %v412
    %v417 = vadd.f32 %v396, %v413
    %v418 = vadd.f32 %v397, %v414
    %v419 = vadd.f32 %v398, %v411
    %v420 = vadd.f32 %v399, %v412
    %v421 = vadd.f32 %v400, %v413
    %v422 = vadd.f32 %v401, %v414
    %v423 = vmul.f32 %v415, 0.01
    %v424 = vmul.f32 %v416, 0.01
    %v425 = vmul.f32 %v417, 0.01
    %v426 = vmul.f32 %v418, 0.01
    %v427 = vmul.f32 %v419, 0.01
    %v428 = vmul.f32 %v420, 0.01
    %v429 = vmul.f32 %v421, 0.01
    %v430 = vmul.f32 %v422, 0.01
    %v431 = vmax.f32 %v415, %v423
    %v432 = vmax.f32 %v416, %v424
    %v433 = vmax.f32 %v417, %v425
    %v434 = vmax.f32 %v418, %v426
    %v435 = vmax.f32 %v419, %v427
    %v436 = vmax.f32 %v420, %v428
    %v437 = vmax.f32 %v421, %v429
    %v438 = vmax.f32 %v422, %v430
    %439 = vst [vmem:[#allocation8] sm:$0xff] %v431
    %440 = vst [vmem:[#allocation8 + $0x8] sm:$0xff] %v432
    %441 = vst [vmem:[#allocation8 + $0x10] sm:$0xff] %v433
    %442 = vst [vmem:[#allocation8 + $0x18] sm:$0xff] %v434
    %443 = vst [vmem:[#allocation8 + $0x20] sm:$0xff] %v435
    %444 = vst [vmem:[#allocation8 + $0x28] sm:$0xff] %v436
    %445 = vst [vmem:[#allocation8 + $0x30] sm:$0xff] %v437
    %446 = vst [vmem:[#allocation8 + $0x38] sm:$0xff] %v438
    // Predicated region
    $region26: #{tpu_custom_call.1} parent=1 // pred_check
      _
    $region27: #{tpu_custom_call.1} parent=1 // pred_check_branch
      %448 = sbr.rel (0) target = $region29
    $region28: #{tpu_custom_call.1} parent=1 // pred_region
      %450 = vsyncadd [#allocation4], 0
      %s451 = sshll.u32 [#allocation8], 4
      %s452 = int_to_ptr.vmem [resolvable:$true] %s451
      %s453 = sshll.u32 %s3, 4
      %s454 = int_to_ptr.hbm [resolvable:$true] %s453
      %459 = dma.vmem_to_hbm [thread:$0]  %s452, 1024, %s454, [#allocation4], 512, 512, 32
    $region29: #{tpu_custom_call.1} parent=1 // pred_fallthru
      _
    // Predicated region
    $region30: #{tpu_custom_call.1} parent=1 // pred_check
      _
    $region31: #{tpu_custom_call.1} parent=1 // pred_check_branch
      %461 = sbr.rel (0) target = $region33
    $region32: #{tpu_custom_call.1} parent=1 // pred_region
      %463 = dma.done [#allocation4], 1024
    $region33: #{tpu_custom_call.1} parent=1 // pred_fallthru
      _
    %464 = vsyncpa [#allocation3], 1
    %465 = vsyncpa [#allocation6], 1
    %466 = vsyncpa [#allocation4], 1

</llo_original>
